<compile_context>
chip_gen: v7x
topology: tpu7x:2x2x1
jax: 0.10.0
libtpu: 0.0.40
codegen_flags: <defaults>
</compile_context>

<pallas_src>
import jax
import jax.numpy as jnp
from jax.experimental import pallas as pl
from jax.experimental.pallas import tpu as pltpu


_TILE_BUDGET_BYTES = 4 << 20   # ~4 MiB per in/out tile buffer
_VMEM_LIMIT_BYTES = 32 << 20   # 2*in + 2*out double-buffers + scale/bias ~= 16 MiB << 32 MiB
                               # (fits v5e/v6e 128 MiB and v7x 64 MiB physical VMEM)


def _normalization_kernel(x_ref, scale_ref, bias_ref, o_ref):
    # x_ref:     (TILE_R, TILE_HW) tile of the (N*C, H*W) image view
    # scale_ref: (TILE_R, 1)  f32 per-row 1/std    (broadcast over the lane axis)
    # bias_ref:  (TILE_R, 1)  f32 per-row -mean/std
    x = x_ref[...].astype(jnp.float32)
    o_ref[...] = (x * scale_ref[...] + bias_ref[...]).astype(o_ref.dtype)


def _choose_tiles(R, HW, itemsize):
    """Pick (tile_r, tile_hw) from a per-buffer VMEM byte budget.

    tile_r: multiple of 8 when R >= 8, else the full (small) extent.
    tile_hw: multiple of 128 or the full HW extent, sized so one tile is ~4 MiB.
    """
    tile_r = R if R < 8 else min(256, (R // 8) * 8)

    max_lanes = max(128, _TILE_BUDGET_BYTES // max(1, tile_r * itemsize))
    if HW <= max_lanes:
        tile_hw = HW                                  # full extent (always legal)
    else:
        tile_hw = max(128, (max_lanes // 128) * 128)  # multiple of 128

    # Megacore (v7x has 2 TensorCores): if the whole spatial axis fits a single
    # block but that block is big enough to matter (> ~1 MiB), split it so the
    # leading 'parallel' grid axis has >= 2 blocks and the 2nd core gets work.
    n_hw = -(-HW // tile_hw)
    if n_hw == 1 and HW >= 256 and tile_r * HW * itemsize > (1 << 20):
        tile_hw = max(128, ((HW // 2) // 128) * 128)

    return tile_r, tile_hw


def normalization_forward(img, mean, std):
    """img: (N, C, H, W); mean/std: (C,). Returns (img - mean[:,None,None]) / std[:,None,None]."""
    N, C, H, W = img.shape
    HW = H * W
    R = N * C

    x2d = img.reshape(R, HW)

    # FMA form: (x - mean) / std == x * (1/std) + (-mean/std).
    # Kept in float32 (not cast to img.dtype) so bf16/fp16 inputs don't round the
    # per-channel constants before the in-kernel FMA.
    mean_f = jnp.asarray(mean, jnp.float32).reshape(-1)
    std_f = jnp.asarray(std, jnp.float32).reshape(-1)
    scale_c = 1.0 / std_f                 # (C,)
    bias_c = -mean_f / std_f              # (C,)
    # Row r of the 2D view corresponds to channel r % C.
    row_scale = jnp.tile(scale_c, N).reshape(R, 1)
    row_bias = jnp.tile(bias_c, N).reshape(R, 1)

    itemsize = jnp.dtype(img.dtype).itemsize
    tile_r, tile_hw = _choose_tiles(R, HW, itemsize)

    # Spatial axis first so the megacore-shardable leading axis has >= 2 blocks
    # whenever the budget splits HW (the small-N style-transfer case has R=3 only).
    grid = (pl.cdiv(HW, tile_hw), pl.cdiv(R, tile_r))

    cost = pl.CostEstimate(
        flops=2 * R * HW,
        transcendentals=0,
        bytes_accessed=2 * R * HW * itemsize + 2 * R * 4,
    )

    out2d = pl.pallas_call(
        _normalization_kernel,
        out_shape=jax.ShapeDtypeStruct((R, HW), img.dtype),
        grid_spec=pltpu.PrefetchScalarGridSpec(
            num_scalar_prefetch=0,
            grid=grid,
            in_specs=[
                pl.BlockSpec((tile_r, tile_hw), lambda j, i: (i, j)),
                pl.BlockSpec((tile_r, 1), lambda j, i: (i, 0)),
                pl.BlockSpec((tile_r, 1), lambda j, i: (i, 0)),
            ],
            out_specs=pl.BlockSpec((tile_r, tile_hw), lambda j, i: (i, j)),
        ),
        compiler_params=pltpu.CompilerParams(
            dimension_semantics=("parallel", "parallel"),
            vmem_limit_bytes=_VMEM_LIMIT_BYTES,
        ),
        cost_estimate=cost,
    )(x2d, row_scale, row_bias)

    return out2d.reshape(N, C, H, W)


if __name__ == "__main__":
    key = jax.random.PRNGKey(0)
    N, C, H, W = 2, 4, 16, 16

    k_img, k_mean, k_std = jax.random.split(key, 3)
    img = jax.random.uniform(k_img, (N, C, H, W), dtype=jnp.float32)
    # Deterministic per-channel mean/std (std strictly positive).
    mean = jax.random.uniform(k_mean, (C,), dtype=jnp.float32, minval=0.1, maxval=0.9)
    std = jax.random.uniform(k_std, (C,), dtype=jnp.float32, minval=0.1, maxval=0.5)

    out = normalization_forward(img, mean, std)
    out = jax.block_until_ready(out)

    # Reference in plain JAX with the exact PyTorch-module semantics.
    ref = (img - mean.reshape(1, C, 1, 1)) / std.reshape(1, C, 1, 1)
    assert out.shape == (N, C, H, W)
    # Tolerance slightly relaxed vs exact divide: precomputed 1/std + mul/add
    # differs from a true divide by a few ULP.
    assert jnp.allclose(out, ref, rtol=1e-5, atol=1e-5)

    print("KERNEL_OK")
</pallas_src>

<mosaic_0001>
module attributes {stable_mosaic.version = 11 : i64} {
  func.func @_normalization_kernel(%arg0: i32, %arg1: i32, %arg2: memref<8x256xf32, #tpu.memory_space<vmem>>, %arg3: memref<8x1xf32, #tpu.memory_space<vmem>>, %arg4: memref<8x1xf32, #tpu.memory_space<vmem>>, %arg5: memref<8x256xf32, #tpu.memory_space<vmem>>) attributes {dimension_semantics = [#tpu.dimension_semantics<parallel>, #tpu.dimension_semantics<parallel>], iteration_bounds = array<i64: 1, 1>, scalar_prefetch = 0 : i64, scratch_operands = 0 : i64, tpu.core_type = #tpu.core_type<tc>, window_params = [{transform_indices = @transform_0, window_bounds = array<i64: 8, 256>}, {transform_indices = @transform_1, window_bounds = array<i64: 8, 1>}, {transform_indices = @transform_2, window_bounds = array<i64: 8, 1>}, {transform_indices = @transform_3, window_bounds = array<i64: 8, 256>}]} {
    %c0 = arith.constant 0 : index
    %c0_0 = arith.constant 0 : index
    %0 = vector.load %arg2[%c0, %c0_0] : memref<8x256xf32, #tpu.memory_space<vmem>>, vector<8x256xf32>
    %c0_1 = arith.constant 0 : index
    %c0_2 = arith.constant 0 : index
    %1 = vector.load %arg3[%c0_1, %c0_2] : memref<8x1xf32, #tpu.memory_space<vmem>>, vector<8x1xf32>
    %2 = vector.broadcast %1 : vector<8x1xf32> to vector<8x256xf32>
    %3 = arith.mulf %0, %2 : vector<8x256xf32>
    %c0_3 = arith.constant 0 : index
    %c0_4 = arith.constant 0 : index
    %4 = vector.load %arg4[%c0_3, %c0_4] : memref<8x1xf32, #tpu.memory_space<vmem>>, vector<8x1xf32>
    %5 = vector.broadcast %4 : vector<8x1xf32> to vector<8x256xf32>
    %6 = arith.addf %3, %5 : vector<8x256xf32>
    %c0_5 = arith.constant 0 : index
    %c0_6 = arith.constant 0 : index
    %7 = vector.load %arg5[%c0_5, %c0_6] : memref<8x256xf32, #tpu.memory_space<vmem>>, vector<8x256xf32>
    tpu.vector_store %arg5[%c0_5, %c0_6], %6 {strides = array<i32>} : memref<8x256xf32, #tpu.memory_space<vmem>>, vector<8x256xf32>,
    return
  }
  func.func @transform_0(%arg0: i32, %arg1: i32) -> (i32, i32) {
    %c0_i32 = arith.constant 0 : i32
    return %arg1, %arg0 : i32, i32
  }
  func.func @transform_1(%arg0: i32, %arg1: i32) -> (i32, i32) {
    %c0_i32 = arith.constant 0 : i32
    %c0_i32_0 = arith.constant 0 : i32
    return %arg1, %c0_i32 : i32, i32
  }
  func.func @transform_2(%arg0: i32, %arg1: i32) -> (i32, i32) {
    %c0_i32 = arith.constant 0 : i32
    %c0_i32_0 = arith.constant 0 : i32
    return %arg1, %c0_i32 : i32, i32
  }
  func.func @transform_3(%arg0: i32, %arg1: i32) -> (i32, i32) {
    %c0_i32 = arith.constant 0 : i32
    return %arg1, %arg0 : i32, i32
  }
}

</mosaic_0001>

<llo_original>
// kernel: tpu_custom_call.1
$region0: #{tpu_custom_call.1}
  #allocation0 [shape = 'u32[]', space=smem, size = 0x4, offset = 0x4, fixed_abs, tag = 'smem constant byte address 0x4 - core index']
  #allocation1 [shape = 'u32[144,128]{1,0:T(1,128)}', space=vmem, size = 0x12000, scoped, tag = 'internal scratch']
  %s0 = inlined_call_operand.vmem [shape: f32[8,256], index: 0, kind: input, shape index: {}]
  %s1 = inlined_call_operand.vmem [shape: f32[8,1], index: 1, kind: input, shape index: {}]
  %s2 = inlined_call_operand.vmem [shape: f32[8,1], index: 2, kind: input, shape index: {}]
  %s3 = inlined_call_operand.hbm [shape: f32[8,256], index: 3, kind: output, shape index: {}]
  %s4 = sld [smem:[#allocation0]]
  $region22: #{tpu_custom_call.1} parent=0
    _
  %s6 = ssub.s32 1, %s4
  %s7 = scalar_select 0, %s6, %s4
  $region1: #{tpu_custom_call.1} parent=0
    #allocation2 [shape = 'u8[8192]{0}', space=vmem, size = 0x2000, scoped, tag = 'output window, operand 0, single buffered']
    #allocation3 [shape = 's32[1]{0}', space=sflag, size = 0x4, scoped, tag = 'scoped memory for tpu_custom_call.1']
    %8 = vsyncpa [#allocation3], 0
    // Predicated region
    $region2: #{tpu_custom_call.1} parent=1 // pred_check
      _
    $region3: #{tpu_custom_call.1} parent=1 // pred_check_branch
      %10 = sbr.rel (0) target = $region5
    $region4: #{tpu_custom_call.1} parent=1 // pred_region
      _
    $region5: #{tpu_custom_call.1} parent=1 // pred_fallthru
      _
    // Predicated region
    $region6: #{tpu_custom_call.1} parent=1 // pred_check
      _
    $region7: #{tpu_custom_call.1} parent=1 // pred_check_branch
      %12 = sbr.rel (0) target = $region9
    $region8: #{tpu_custom_call.1} parent=1 // pred_region
      _
    $region9: #{tpu_custom_call.1} parent=1 // pred_fallthru
      _
    // Predicated region
    $region10: #{tpu_custom_call.1} parent=1 // pred_check
      _
    $region11: #{tpu_custom_call.1} parent=1 // pred_check_branch
      %14 = sbr.rel (0) target = $region13
    $region12: #{tpu_custom_call.1} parent=1 // pred_region
      _
    $region13: #{tpu_custom_call.1} parent=1 // pred_fallthru
      _
    %v15 = vld [vmem:[%s0] sm:$0xff]
    %v16 = vld [vmem:[%s0 + $0x8] sm:$0xff]
    %v17 = vld [vmem:[%s1] sm:$0xff]
    %19 = vset.pattern.permute.xlu0 0
    %20 = vperm.xlu0 %19, %v17
    %v21 = vpop.permute.xlu0 %20
    %v23 = vmul.f32 %v15, %v21
    %v24 = vmul.f32 %v16, %v21
    %v25 = vld [vmem:[%s2] sm:$0xff]
    %27 = vset.pattern.permute.xlu0 0
    %28 = vperm.xlu0 %27, %v25
    %v29 = vpop.permute.xlu0 %28
    %v31 = vadd.f32 %v23, %v29
    %v32 = vadd.f32 %v24, %v29
    %33 = vst [vmem:[#allocation2] sm:$0xff] %v31
    %34 = vst [vmem:[#allocation2 + $0x8] sm:$0xff] %v32
    // Predicated region
    $region14: #{tpu_custom_call.1} parent=1 // pred_check
      _
    $region15: #{tpu_custom_call.1} parent=1 // pred_check_branch
      %36 = sbr.rel (0) target = $region17
    $region16: #{tpu_custom_call.1} parent=1 // pred_region
      %s38 = ssub.s32 256, 256
      %39 = vsyncadd [#allocation3], %s38
      %s41 = sshll.u32 [#allocation2], 4
      %s42 = int_to_ptr.vmem [resolvable:$true] %s41
      %44 = dma.vmem_to_hbm [thread:$0]  %s42, 256, %s3, [#allocation3]
    $region17: #{tpu_custom_call.1} parent=1 // pred_fallthru
      _
    // Predicated region
    $region18: #{tpu_custom_call.1} parent=1 // pred_check
      _
    $region19: #{tpu_custom_call.1} parent=1 // pred_check_branch
      %46 = sbr.rel (0) target = $region21
    $region20: #{tpu_custom_call.1} parent=1 // pred_region
      %47 = dma.done [#allocation3], 256
    $region21: #{tpu_custom_call.1} parent=1 // pred_fallthru
      _
    %48 = vsyncpa [#allocation3], 1

</llo_original>
